<compile_context>
chip_gen: v7x
topology: tpu7x:2x2x1
jax: 0.10.0
libtpu: 0.0.40
codegen_flags: <defaults>
</compile_context>

<pallas_src>
import jax
import jax.numpy as jnp
from jax.experimental import pallas as pl
from jax.experimental.pallas import tpu as pltpu


# ----------------------------------------------------------------------------
# Helpers
# ----------------------------------------------------------------------------

def _round_up(x: int, m: int) -> int:
    return ((x + m - 1) // m) * m


def _pad2(x, rows: int, cols: int):
    """Zero-pad a 2-D array up to (rows, cols); no-op if already that shape."""
    pr, pc = rows - x.shape[0], cols - x.shape[1]
    if pr == 0 and pc == 0:
        return x
    return jnp.pad(x, ((0, pr), (0, pc)))


def _largest_aligned_divisor(total: int, cap: int, align: int) -> int:
    """Largest d such that d | total, d % align == 0, d <= cap.
    `total` is assumed to be a multiple of `align`, so `align` always works."""
    cap = min(cap, total)
    best = align
    d = align
    while d <= cap:
        if total % d == 0:
            best = d
        d += align
    return best


def _sigmoid(x):
    # sigmoid(x) == 0.5 * tanh(0.5 * x) + 0.5.  tanh is a single EUP op (a
    # free bundle slot alongside VALU/MXU work) vs. exp + divide on the VPU.
    return 0.5 * jnp.tanh(0.5 * x) + 0.5


# ----------------------------------------------------------------------------
# Kernels
# ----------------------------------------------------------------------------

def gate_control_kernel_k1(p_ref, r_ref, wp_ref, wr_ref, b_ref, o_ref):
    """Single-K-tile fast path: no scratch accumulator, fused epilogue."""
    d = jnp.dot(p_ref[...], wp_ref[...], preferred_element_type=jnp.float32)
    d = d + jnp.dot(r_ref[...], wr_ref[...], preferred_element_type=jnp.float32)
    o_ref[...] = _sigmoid(d + b_ref[...]).astype(o_ref.dtype)


def gate_control_kernel(p_ref, r_ref, wp_ref, wr_ref, b_ref, o_ref, acc_ref):
    """Multi-K path: f32 accumulator, bias folded into the k==0 init, and a
    single accumulator read-modify-write per grid step (d1 + d2 fused)."""
    k = pl.program_id(2)

    @pl.when(k == 0)
    def _init():
        # Bias fold: start the accumulator at the (broadcast) bias row.
        acc_ref[...] = jnp.broadcast_to(b_ref[...], acc_ref.shape)

    d = jnp.dot(p_ref[...], wp_ref[...], preferred_element_type=jnp.float32)
    d = d + jnp.dot(r_ref[...], wr_ref[...], preferred_element_type=jnp.float32)
    acc_ref[...] += d

    @pl.when(k == pl.num_programs(2) - 1)
    def _finalize():
        o_ref[...] = _sigmoid(acc_ref[...]).astype(o_ref.dtype)


# ----------------------------------------------------------------------------
# Wrappers
# ----------------------------------------------------------------------------

def prepare_gate_params(wp, bp, wr, br, *, weight_dtype=None):
    """One-time parameter preparation (hoisted off the per-call hot path):
      * transpose nn.Linear weights (H_out, H_in) -> (H_in, H_out) so the
        kernel runs a plain NN contraction (no per-tile XLU transposes),
      * zero-pad to 128-aligned (Hk, Hn) lane-dense extents,
      * optionally cast to a narrow streaming dtype (bf16 on v5e/v6e),
      * pre-sum both biases into one padded (1, Hn) f32 row.
    Weights are parameters — pay the pad/cast/transpose once and cache."""
    H_out, H_in = wp.shape
    assert wp.shape == wr.shape == (H_out, H_in) and H_out == H_in
    H = H_out
    Hn = _round_up(H, 128)   # output-feature (N / lane) axis
    Hk = _round_up(H, 128)   # contraction (K) axis

    if weight_dtype is not None:
        wp = wp.astype(weight_dtype)
        wr = wr.astype(weight_dtype)
    wp_t = _pad2(wp.T, Hk, Hn)
    wr_t = _pad2(wr.T, Hk, Hn)

    if bp is None and br is None:
        bsum = jnp.zeros((H,), jnp.float32)
    else:
        bsum = (bp if bp is not None else 0.0) + (br if br is not None else 0.0)
    bias = _pad2(jnp.asarray(bsum, jnp.float32).reshape(1, H), 1, Hn)

    # TODO(synk): on v7x, prefer an fp8 weight stream with a per-channel scale
    # folded into the epilogue (halves weight HBM traffic; v7x MXU has no int8).
    return {"wp_t": wp_t, "wr_t": wr_t, "bias": bias, "hidden": H}


def gate_control(protonet, relation, params, *,
                 tm_max=512, tn_max=512, tk_max=1024):
    """protonet, relation: (B, H); params: output of prepare_gate_params.
    Returns sigmoid(pro_gate(protonet) + rel_gate(relation))."""
    B, H = protonet.shape
    assert relation.shape == (B, H) and params["hidden"] == H
    wp_t, wr_t, bias = params["wp_t"], params["wr_t"], params["bias"]
    Hk, Hn = wp_t.shape
    out_dtype = protonet.dtype

    # Sublane multiple depends on the packed activation dtype (8 f32, 16 bf16).
    a_isz = jnp.dtype(protonet.dtype).itemsize
    sub = max(8, 32 // a_isz)
    Bm = _round_up(B, sub)

    # Tile sizes = largest aligned divisors of the padded extents (no rounding
    # the extents up to tile multiples -> no padding-induced HBM/MXU waste).
    tm = _largest_aligned_divisor(Bm, tm_max, sub)
    tn = _largest_aligned_divisor(Hn, tn_max, 128)
    tk = _largest_aligned_divisor(Hk, tk_max, 128)

    # v7x has 2 TensorCores sharded over the "parallel" grid axes: if the
    # batch fills a single M tile, split N so both cores get a block.
    if Bm // tm == 1 and Hn // tn == 1 and Hn >= 256:
        tn = _largest_aligned_divisor(Hn, Hn // 2, 128)

    mg, ng, kg = Bm // tm, Hn // tn, Hk // tk

    # Per-call work: pad only the (small) activation strips.
    p = _pad2(protonet, Bm, Hk)
    r = _pad2(relation, Bm, Hk)

    # Explicit VMEM budget: double-buffered inputs + output, plus f32 scratch.
    # (v5e scoped default is only 16 MiB; cap at 56 MiB for v7x's 64 MiB VMEM.)
    w_isz = jnp.dtype(wp_t.dtype).itemsize
    o_isz = jnp.dtype(out_dtype).itemsize
    resident = (2 * (2 * tm * tk * a_isz          # protonet + relation tiles
                     + 2 * tk * tn * w_isz        # Wp^T + Wr^T tiles
                     + tn * 4)                    # bias row
                + 2 * tm * tn * o_isz             # output tile
                + (tm * tn * 4 if kg > 1 else 0))  # f32 accumulator
    vmem_limit = min(max(int(1.25 * resident) + (2 << 20), 20 << 20), 56 << 20)

    if kg == 1:
        # Common small/medium-H gate: single K tile, no scratch accumulator.
        out = pl.pallas_call(
            gate_control_kernel_k1,
            out_shape=jax.ShapeDtypeStruct((Bm, Hn), out_dtype),
            grid=(mg, ng),
            in_specs=[
                pl.BlockSpec((tm, tk), lambda i, j: (i, 0)),   # protonet
                pl.BlockSpec((tm, tk), lambda i, j: (i, 0)),   # relation
                pl.BlockSpec((tk, tn), lambda i, j: (0, j)),   # Wp^T (pre-T'd)
                pl.BlockSpec((tk, tn), lambda i, j: (0, j)),   # Wr^T (pre-T'd)
                pl.BlockSpec((1, tn), lambda i, j: (0, j)),    # bp + br
            ],
            out_specs=pl.BlockSpec((tm, tn), lambda i, j: (i, j)),
            compiler_params=pltpu.CompilerParams(
                dimension_semantics=("parallel", "parallel"),
                vmem_limit_bytes=vmem_limit),
        )(p, r, wp_t, wr_t, bias)
    else:
        out = pl.pallas_call(
            gate_control_kernel,
            out_shape=jax.ShapeDtypeStruct((Bm, Hn), out_dtype),
            grid=(mg, ng, kg),
            in_specs=[
                pl.BlockSpec((tm, tk), lambda i, j, k: (i, k)),   # protonet
                pl.BlockSpec((tm, tk), lambda i, j, k: (i, k)),   # relation
                pl.BlockSpec((tk, tn), lambda i, j, k: (k, j)),   # Wp^T
                pl.BlockSpec((tk, tn), lambda i, j, k: (k, j)),   # Wr^T
                pl.BlockSpec((1, tn), lambda i, j, k: (0, j)),    # bp + br
            ],
            out_specs=pl.BlockSpec((tm, tn), lambda i, j, k: (i, j)),
            scratch_shapes=[pltpu.VMEM((tm, tn), jnp.float32)],
            compiler_params=pltpu.CompilerParams(
                dimension_semantics=("parallel", "parallel", "arbitrary"),
                vmem_limit_bytes=vmem_limit),
        )(p, r, wp_t, wr_t, bias)

    return out[:B, :H]


def gate_control_ref(protonet, relation, wp, bp, wr, br):
    # Pure-JAX reference matching torch.nn.Linear semantics (x @ W^T + b).
    a = protonet @ wp.T + bp
    b = relation @ wr.T + br
    return jax.nn.sigmoid(a + b)


# ----------------------------------------------------------------------------
# Demo / smoke test
# ----------------------------------------------------------------------------

if __name__ == "__main__":
    key = jax.random.PRNGKey(0)

    # ---- Test 1: f32, small hidden (exercises the K-grid==1 fast path) -----
    batch, hidden = 8, 32
    k1, k2, k3, k4, k5, k6, k7 = jax.random.split(key, 7)
    bound = 1.0 / (hidden ** 0.5)
    wp = jax.random.uniform(k1, (hidden, hidden), jnp.float32, -bound, bound)
    bp = jax.random.uniform(k2, (hidden,), jnp.float32, -bound, bound)
    wr = jax.random.uniform(k3, (hidden, hidden), jnp.float32, -bound, bound)
    br = jax.random.uniform(k4, (hidden,), jnp.float32, -bound, bound)
    protonet = jax.random.normal(k5, (batch, hidden), jnp.float32)
    relation = jax.random.normal(k6, (batch, hidden), jnp.float32)

    ref = gate_control_ref(protonet, relation, wp, bp, wr, br)

    params_f32 = prepare_gate_params(wp, bp, wr, br)          # one-time prep
    out = gate_control(protonet, relation, params_f32)
    out = jax.block_until_ready(out)
    assert out.shape == (batch, hidden)
    assert jnp.allclose(out, ref, atol=1e-5, rtol=1e-5), "f32 mismatch"

    # ---- Test 2: bf16 activation/weight streams (v5e/v6e recommendation) ---
    bf = jnp.bfloat16
    params_bf16 = prepare_gate_params(wp, bp, wr, br, weight_dtype=bf)
    out_bf = gate_control(protonet.astype(bf), relation.astype(bf), params_bf16)
    out_bf = jax.block_until_ready(out_bf)
    assert jnp.allclose(out_bf.astype(jnp.float32), ref, atol=2e-2, rtol=2e-2), \
        "bf16 mismatch"

    # ---- Test 3: multi-tile grid (exercises accumulator + bias-fold path) ---
    hidden2 = 256
    ka, kb, kc, kd, ke, kf = jax.random.split(k7, 6)
    bound2 = 1.0 / (hidden2 ** 0.5)
    wp2 = jax.random.uniform(ka, (hidden2, hidden2), jnp.float32, -bound2, bound2)
    bp2 = jax.random.uniform(kb, (hidden2,), jnp.float32, -bound2, bound2)
    wr2 = jax.random.uniform(kc, (hidden2, hidden2), jnp.float32, -bound2, bound2)
    br2 = jax.random.uniform(kd, (hidden2,), jnp.float32, -bound2, bound2)
    p2 = jax.random.normal(ke, (batch, hidden2), jnp.float32)
    r2 = jax.random.normal(kf, (batch, hidden2), jnp.float32)

    ref2 = gate_control_ref(p2, r2, wp2, bp2, wr2, br2)
    params2 = prepare_gate_params(wp2, bp2, wr2, br2)
    out2 = gate_control(p2, r2, params2, tn_max=128, tk_max=128)  # grid (1,2,2)
    out2 = jax.block_until_ready(out2)
    assert out2.shape == (batch, hidden2)
    assert jnp.allclose(out2, ref2, atol=5e-5, rtol=5e-5), "multi-K mismatch"

    print("KERNEL_OK")
</pallas_src>

<mosaic_0001>
module attributes {stable_mosaic.version = 11 : i64} {
  func.func @gate_control_kernel_k1(%arg0: i32, %arg1: i32, %arg2: memref<8x128xf32, #tpu.memory_space<vmem>>, %arg3: memref<8x128xf32, #tpu.memory_space<vmem>>, %arg4: memref<128x128xf32, #tpu.memory_space<vmem>>, %arg5: memref<128x128xf32, #tpu.memory_space<vmem>>, %arg6: memref<1x128xf32, #tpu.memory_space<vmem>>, %arg7: memref<8x128xf32, #tpu.memory_space<vmem>>) attributes {dimension_semantics = [#tpu.dimension_semantics<parallel>, #tpu.dimension_semantics<parallel>], iteration_bounds = array<i64: 1, 1>, scalar_prefetch = 0 : i64, scratch_operands = 0 : i64, tpu.core_type = #tpu.core_type<tc>, window_params = [{transform_indices = @transform_0, window_bounds = array<i64: 8, 128>}, {transform_indices = @transform_1, window_bounds = array<i64: 8, 128>}, {transform_indices = @transform_2, window_bounds = array<i64: 128, 128>}, {transform_indices = @transform_3, window_bounds = array<i64: 128, 128>}, {transform_indices = @transform_4, window_bounds = array<i64: 1, 128>}, {transform_indices = @transform_5, window_bounds = array<i64: 8, 128>}]} {
    %c0 = arith.constant 0 : index
    %c0_0 = arith.constant 0 : index
    %0 = vector.load %arg2[%c0, %c0_0] : memref<8x128xf32, #tpu.memory_space<vmem>>, vector<8x128xf32>
    %c0_1 = arith.constant 0 : index
    %c0_2 = arith.constant 0 : index
    %1 = vector.load %arg4[%c0_1, %c0_2] : memref<128x128xf32, #tpu.memory_space<vmem>>, vector<128x128xf32>
    %cst = arith.constant dense<0.000000e+00> : vector<8x128xf32>
    %2 = tpu.matmul %0, %1, %cst {dimension_numbers = #tpu.dot_dimension_numbers<[1], [0], [0], [1], [0, 0, 1, 1], [], []>} : vector<8x128xf32>, vector<128x128xf32>, vector<8x128xf32> -> vector<8x128xf32>
    %c0_3 = arith.constant 0 : index
    %c0_4 = arith.constant 0 : index
    %3 = vector.load %arg3[%c0_3, %c0_4] : memref<8x128xf32, #tpu.memory_space<vmem>>, vector<8x128xf32>
    %c0_5 = arith.constant 0 : index
    %c0_6 = arith.constant 0 : index
    %4 = vector.load %arg5[%c0_5, %c0_6] : memref<128x128xf32, #tpu.memory_space<vmem>>, vector<128x128xf32>
    %cst_7 = arith.constant dense<0.000000e+00> : vector<8x128xf32>
    %5 = tpu.matmul %3, %4, %cst_7 {dimension_numbers = #tpu.dot_dimension_numbers<[1], [0], [0], [1], [0, 0, 1, 1], [], []>} : vector<8x128xf32>, vector<128x128xf32>, vector<8x128xf32> -> vector<8x128xf32>
    %6 = arith.addf %2, %5 : vector<8x128xf32>
    %c0_8 = arith.constant 0 : index
    %c0_9 = arith.constant 0 : index
    %7 = vector.load %arg6[%c0_8, %c0_9] : memref<1x128xf32, #tpu.memory_space<vmem>>, vector<1x128xf32>
    %8 = vector.broadcast %7 : vector<1x128xf32> to vector<8x128xf32>
    %9 = arith.addf %6, %8 : vector<8x128xf32>
    %cst_10 = arith.constant 5.000000e-01 : f32
    %10 = vector.broadcast %cst_10 : f32 to vector<8x128xf32>
    %11 = arith.mulf %10, %9 : vector<8x128xf32>
    %12 = math.tanh %11 : vector<8x128xf32>
    %cst_11 = arith.constant 5.000000e-01 : f32
    %13 = vector.broadcast %cst_11 : f32 to vector<8x128xf32>
    %14 = arith.mulf %13, %12 : vector<8x128xf32>
    %cst_12 = arith.constant 5.000000e-01 : f32
    %15 = vector.broadcast %cst_12 : f32 to vector<8x128xf32>
    %16 = arith.addf %14, %15 : vector<8x128xf32>
    %c0_13 = arith.constant 0 : index
    %c0_14 = arith.constant 0 : index
    %17 = vector.load %arg7[%c0_13, %c0_14] : memref<8x128xf32, #tpu.memory_space<vmem>>, vector<8x128xf32>
    tpu.vector_store %arg7[%c0_13, %c0_14], %16 {strides = array<i32>} : memref<8x128xf32, #tpu.memory_space<vmem>>, vector<8x128xf32>,
    return
  }
  func.func @transform_0(%arg0: i32, %arg1: i32) -> (i32, i32) {
    %c0_i32 = arith.constant 0 : i32
    %c0_i32_0 = arith.constant 0 : i32
    return %arg0, %c0_i32 : i32, i32
  }
  func.func @transform_1(%arg0: i32, %arg1: i32) -> (i32, i32) {
    %c0_i32 = arith.constant 0 : i32
    %c0_i32_0 = arith.constant 0 : i32
    return %arg0, %c0_i32 : i32, i32
  }
  func.func @transform_2(%arg0: i32, %arg1: i32) -> (i32, i32) {
    %c0_i32 = arith.constant 0 : i32
    %c0_i32_0 = arith.constant 0 : i32
    return %c0_i32, %arg1 : i32, i32
  }
  func.func @transform_3(%arg0: i32, %arg1: i32) -> (i32, i32) {
    %c0_i32 = arith.constant 0 : i32
    %c0_i32_0 = arith.constant 0 : i32
    return %c0_i32, %arg1 : i32, i32
  }
  func.func @transform_4(%arg0: i32, %arg1: i32) -> (i32, i32) {
    %c0_i32 = arith.constant 0 : i32
    %c0_i32_0 = arith.constant 0 : i32
    return %c0_i32, %arg1 : i32, i32
  }
  func.func @transform_5(%arg0: i32, %arg1: i32) -> (i32, i32) {
    %c0_i32 = arith.constant 0 : i32
    return %arg0, %arg1 : i32, i32
  }
}

</mosaic_0001>

<llo_original>
// kernel: tpu_custom_call.1
$region0: #{tpu_custom_call.1}
  #allocation0 [shape = 'u32[]', space=smem, size = 0x4, offset = 0x4, fixed_abs, tag = 'smem constant byte address 0x4 - core index']
  #allocation1 [shape = 'u32[144,128]{1,0:T(1,128)}', space=vmem, size = 0x12000, scoped, tag = 'internal scratch']
  %s0 = inlined_call_operand.hbm [shape: f32[8,128], index: 0, kind: input, shape index: {}]
  %s1 = inlined_call_operand.hbm [shape: f32[8,128], index: 1, kind: input, shape index: {}]
  %s2 = inlined_call_operand.hbm [shape: f32[128,128], index: 2, kind: input, shape index: {}]
  %s3 = inlined_call_operand.hbm [shape: f32[128,128], index: 3, kind: input, shape index: {}]
  %s4 = inlined_call_operand.vmem [shape: f32[1,128], index: 4, kind: input, shape index: {}]
  %s5 = inlined_call_operand.hbm [shape: f32[8,128], index: 5, kind: output, shape index: {}]
  %s6 = sld [smem:[#allocation0]]
  $region46: #{tpu_custom_call.1} parent=0
    _
  %s8 = ssub.s32 1, %s6
  %s9 = scalar_select 0, %s8, %s6
  $region1: #{tpu_custom_call.1} parent=0
    #allocation2 [shape = 'u8[4096]{0}', space=vmem, size = 0x1000, scoped, tag = 'input window, operand 0, single buffered']
    #allocation3 [shape = 's32[1]{0}', space=sflag, size = 0x4, scoped, tag = 'scoped memory for tpu_custom_call.1']
    #allocation4 [shape = 's32[1]{0}', space=sflag, size = 0x4, scoped, tag = 'scoped memory for tpu_custom_call.1']
    #allocation5 [shape = 'u8[4096]{0}', space=vmem, size = 0x1000, scoped, tag = 'input window, operand 1, single buffered']
    #allocation6 [shape = 's32[1]{0}', space=sflag, size = 0x4, scoped, tag = 'scoped memory for tpu_custom_call.1']
    #allocation7 [shape = 'u8[65536]{0}', space=vmem, size = 0x10000, scoped, tag = 'input window, operand 2, single buffered']
    #allocation8 [shape = 'u8[65536]{0}', space=vmem, size = 0x10000, scoped, tag = 'input window, operand 3, single buffered']
    #allocation9 [shape = 's32[1]{0}', space=sflag, size = 0x4, scoped, tag = 'scoped memory for tpu_custom_call.1']
    #allocation10 [shape = 'u8[4096]{0}', space=vmem, size = 0x1000, scoped, tag = 'output window, operand 0, single buffered']
    %10 = vsyncpa [#allocation3], 0
    %11 = vsyncpa [#allocation6], 0
    %12 = vsyncpa [#allocation9], 0
    %13 = vsyncpa [#allocation4], 0
    // Predicated region
    $region2: #{tpu_custom_call.1} parent=1 // pred_check
      _
    $region3: #{tpu_custom_call.1} parent=1 // pred_check_branch
      %15 = sbr.rel (0) target = $region5
    $region4: #{tpu_custom_call.1} parent=1 // pred_region
      %s17 = ssub.s32 128, 128
      %18 = vsyncadd [#allocation3], %s17
      %s20 = sshll.u32 [#allocation2], 4
      %s21 = int_to_ptr.vmem [resolvable:$true] %s20
      %23 = dma.hbm_to_vmem [thread:$0]  %s0, 128, %s21, [#allocation3]
    $region5: #{tpu_custom_call.1} parent=1 // pred_fallthru
      _
    // Predicated region
    $region6: #{tpu_custom_call.1} parent=1 // pred_check
      _
    $region7: #{tpu_custom_call.1} parent=1 // pred_check_branch
      %25 = sbr.rel (0) target = $region9
    $region8: #{tpu_custom_call.1} parent=1 // pred_region
      %s27 = ssub.s32 128, 128
      %28 = vsyncadd [#allocation6], %s27
      %s30 = sshll.u32 [#allocation5], 4
      %s31 = int_to_ptr.vmem [resolvable:$true] %s30
      %33 = dma.hbm_to_vmem [thread:$0]  %s1, 128, %s31, [#allocation6]
    $region9: #{tpu_custom_call.1} parent=1 // pred_fallthru
      _
    // Predicated region
    $region10: #{tpu_custom_call.1} parent=1 // pred_check
      _
    $region11: #{tpu_custom_call.1} parent=1 // pred_check_branch
      %35 = sbr.rel (0) target = $region13
    $region12: #{tpu_custom_call.1} parent=1 // pred_region
      %s37 = ssub.s32 2048, 2048
      %38 = vsyncadd [#allocation6], %s37
      %s39 = sshll.u32 [#allocation7], 4
      %s40 = int_to_ptr.vmem [resolvable:$true] %s39
      %45 = dma.hbm_to_vmem [thread:$0]  %s2, 2048, %s40, [#allocation6], 128, 128, 8
    $region13: #{tpu_custom_call.1} parent=1 // pred_fallthru
      _
    // Predicated region
    $region14: #{tpu_custom_call.1} parent=1 // pred_check
      _
    $region15: #{tpu_custom_call.1} parent=1 // pred_check_branch
      %47 = sbr.rel (0) target = $region17
    $region16: #{tpu_custom_call.1} parent=1 // pred_region
      %s49 = ssub.s32 2048, 2048
      %50 = vsyncadd [#allocation9], %s49
      %s51 = sshll.u32 [#allocation8], 4
      %s52 = int_to_ptr.vmem [resolvable:$true] %s51
      %57 = dma.hbm_to_vmem [thread:$0]  %s3, 2048, %s52, [#allocation9], 128, 128, 8
    $region17: #{tpu_custom_call.1} parent=1 // pred_fallthru
      _
    // Predicated region
    $region18: #{tpu_custom_call.1} parent=1 // pred_check
      _
    $region19: #{tpu_custom_call.1} parent=1 // pred_check_branch
      %59 = sbr.rel (0) target = $region21
    $region20: #{tpu_custom_call.1} parent=1 // pred_region
      _
    $region21: #{tpu_custom_call.1} parent=1 // pred_fallthru
      _
    // Predicated region
    $region22: #{tpu_custom_call.1} parent=1 // pred_check
      _
    $region23: #{tpu_custom_call.1} parent=1 // pred_check_branch
      %61 = sbr.rel (0) target = $region25
    $region24: #{tpu_custom_call.1} parent=1 // pred_region
      %62 = dma.done [#allocation3], 128
    $region25: #{tpu_custom_call.1} parent=1 // pred_fallthru
      _
    // Predicated region
    $region26: #{tpu_custom_call.1} parent=1 // pred_check
      _
    $region27: #{tpu_custom_call.1} parent=1 // pred_check_branch
      %64 = sbr.rel (0) target = $region29
    $region28: #{tpu_custom_call.1} parent=1 // pred_region
      %65 = dma.done [#allocation6], 128
    $region29: #{tpu_custom_call.1} parent=1 // pred_fallthru
      _
    // Predicated region
    $region30: #{tpu_custom_call.1} parent=1 // pred_check
      _
    $region31: #{tpu_custom_call.1} parent=1 // pred_check_branch
      %67 = sbr.rel (0) target = $region33
    $region32: #{tpu_custom_call.1} parent=1 // pred_region
      %68 = dma.done [#allocation6], 2048
    $region33: #{tpu_custom_call.1} parent=1 // pred_fallthru
      _
    // Predicated region
    $region34: #{tpu_custom_call.1} parent=1 // pred_check
      _
    $region35: #{tpu_custom_call.1} parent=1 // pred_check_branch
      %70 = sbr.rel (0) target = $region37
    $region36: #{tpu_custom_call.1} parent=1 // pred_region
      %71 = dma.done [#allocation9], 2048
    $region37: #{tpu_custom_call.1} parent=1 // pred_fallthru
      _
    %v72 = vld [vmem:[#allocation2] sm:$0xff]
    %v73 = vld [vmem:[#allocation7] sm:$0xff]
    %v74 = vld [vmem:[#allocation7 + $0x8] sm:$0xff]
    %v75 = vld [vmem:[#allocation7 + $0x10] sm:$0xff]
    %v76 = vld [vmem:[#allocation7 + $0x18] sm:$0xff]
    %v77 = vld [vmem:[#allocation7 + $0x20] sm:$0xff]
    %v78 = vld [vmem:[#allocation7 + $0x28] sm:$0xff]
    %v79 = vld [vmem:[#allocation7 + $0x30] sm:$0xff]
    %v80 = vld [vmem:[#allocation7 + $0x38] sm:$0xff]
    %v81 = vld [vmem:[#allocation7 + $0x40] sm:$0xff]
    %v82 = vld [vmem:[#allocation7 + $0x48] sm:$0xff]
    %v83 = vld [vmem:[#allocation7 + $0x50] sm:$0xff]
    %v84 = vld [vmem:[#allocation7 + $0x58] sm:$0xff]
    %v85 = vld [vmem:[#allocation7 + $0x60] sm:$0xff]
    %v86 = vld [vmem:[#allocation7 + $0x68] sm:$0xff]
    %v87 = vld [vmem:[#allocation7 + $0x70] sm:$0xff]
    %v88 = vld [vmem:[#allocation7 + $0x78] sm:$0xff]
    %v89 = vld [vmem:[#allocation5] sm:$0xff]
    %v90 = vld [vmem:[#allocation8] sm:$0xff]
    %v91 = vld [vmem:[#allocation8 + $0x8] sm:$0xff]
    %v92 = vld [vmem:[#allocation8 + $0x10] sm:$0xff]
    %v93 = vld [vmem:[#allocation8 + $0x18] sm:$0xff]
    %v94 = vld [vmem:[#allocation8 + $0x20] sm:$0xff]
    %v95 = vld [vmem:[#allocation8 + $0x28] sm:$0xff]
    %v96 = vld [vmem:[#allocation8 + $0x30] sm:$0xff]
    %v97 = vld [vmem:[#allocation8 + $0x38] sm:$0xff]
    %v98 = vld [vmem:[#allocation8 + $0x40] sm:$0xff]
    %v99 = vld [vmem:[#allocation8 + $0x48] sm:$0xff]
    %v100 = vld [vmem:[#allocation8 + $0x50] sm:$0xff]
    %v101 = vld [vmem:[#allocation8 + $0x58] sm:$0xff]
    %v102 = vld [vmem:[#allocation8 + $0x60] sm:$0xff]
    %v103 = vld [vmem:[#allocation8 + $0x68] sm:$0xff]
    %v104 = vld [vmem:[#allocation8 + $0x70] sm:$0xff]
    %v105 = vld [vmem:[#allocation8 + $0x78] sm:$0xff]
    %106 = vmatprep.subr.mxu0 0.0
    %107 = vmatpush1.msra.mxu0 %v90
    %108 = vmatprep.subr.mxu0 0.0
    %109 = vmatpush1.msra.mxu0 %v91
    %110 = vmatprep.subr.mxu0 0.0
    %111 = vmatpush1.msra.mxu0 %v92
    %112 = vmatprep.subr.mxu0 0.0
    %113 = vmatpush1.msra.mxu0 %v93
    %114 = vmatprep.subr.mxu0 0.0
    %115 = vmatpush1.msra.mxu0 %v94
    %116 = vmatprep.subr.mxu0 0.0
    %117 = vmatpush1.msra.mxu0 %v95
    %118 = vmatprep.subr.mxu0 0.0
    %119 = vmatpush1.msra.mxu0 %v96
    %120 = vmatprep.subr.mxu0 0.0
    %121 = vmatpush1.msra.mxu0 %v97
    %122 = vmatprep.subr.mxu0 0.0
    %123 = vmatpush1.msra.mxu0 %v98
    %124 = vmatprep.subr.mxu0 0.0
    %125 = vmatpush1.msra.mxu0 %v99
    %126 = vmatprep.subr.mxu0 0.0
    %127 = vmatpush1.msra.mxu0 %v100
    %128 = vmatprep.subr.mxu0 0.0
    %129 = vmatpush1.msra.mxu0 %v101
    %130 = vmatprep.subr.mxu0 0.0
    %131 = vmatpush1.msra.mxu0 %v102
    %132 = vmatprep.subr.mxu0 0.0
    %133 = vmatpush1.msra.mxu0 %v103
    %134 = vmatprep.subr.mxu0 0.0
    %135 = vmatpush1.msra.mxu0 %v104
    %136 = vmatprep.subr.mxu0 0.0
    %137 = vmatpush1.msra.mxu0 %v105
    %138 = vmatprep.subr.mxu0 0.0
    %139 = vmatpush1.msra.mxu0 0.0
    %140 = vmatprep.subr.mxu0 0.0
    %141 = vmatpush1.msra.mxu0 0.0
    %142 = vmatprep.subr.mxu0 0.0
    %143 = vmatpush1.msra.mxu0 0.0
    %144 = vmatprep.subr.mxu0 0.0
    %145 = vmatpush1.msra.mxu0 0.0
    %146 = vmatprep.subr.mxu0 0.0
    %147 = vmatpush1.msra.mxu0 0.0
    %148 = vmatprep.subr.mxu0 0.0
    %149 = vmatpush1.msra.mxu0 0.0
    %150 = vmatprep.subr.mxu0 0.0
    %151 = vmatpush1.msra.mxu0 0.0
    %152 = vmatprep.subr.mxu0 0.0
    %153 = vmatpush1.msra.mxu0 0.0
    %154 = vmatprep.subr.mxu0 0.0
    %155 = vmatpush1.msra.mxu0 0.0
    %156 = vmatprep.subr.mxu0 0.0
    %157 = vmatpush1.msra.mxu0 0.0
    %158 = vmatprep.subr.mxu0 0.0
    %159 = vmatpush1.msra.mxu0 0.0
    %160 = vmatprep.subr.mxu0 0.0
    %161 = vmatpush1.msra.mxu0 0.0
    %162 = vmatprep.subr.mxu0 0.0
    %163 = vmatpush1.msra.mxu0 0.0
    %164 = vmatprep.subr.mxu0 0.0
    %165 = vmatpush1.msra.mxu0 0.0
    %166 = vmatprep.subr.mxu0 0.0
    %167 = vmatpush1.msra.mxu0 0.0
    %168 = vmatprep.subr.mxu0 0.0
    %169 = vmatpush1.msra.mxu0 0.0
    %170 = vmatprep.mubr.f32.mxu0 0.0
    %171 = vmatmul.mubr.f32.gmra.mrb[0].mxu0 %v89
    %v172 = vpop.f32.mrb[0].mxu0
    %v173 = vadd.f32 0.0, %v172
    %v174 = vpop.f32.mrb[0].mxu0
    %175 = vdwg.mxu0
    %176 = vmatprep.subr.mxu0 0.0
    %177 = vmatpush1.msra.mxu0 %v73
    %178 = vmatprep.subr.mxu0 0.0
    %179 = vmatpush1.msra.mxu0 %v74
    %180 = vmatprep.subr.mxu0 0.0
    %181 = vmatpush1.msra.mxu0 %v75
    %182 = vmatprep.subr.mxu0 0.0
    %183 = vmatpush1.msra.mxu0 %v76
    %184 = vmatprep.subr.mxu0 0.0
    %185 = vmatpush1.msra.mxu0 %v77
    %186 = vmatprep.subr.mxu0 0.0
    %187 = vmatpush1.msra.mxu0 %v78
    %188 = vmatprep.subr.mxu0 0.0
    %189 = vmatpush1.msra.mxu0 %v79
    %190 = vmatprep.subr.mxu0 0.0
    %191 = vmatpush1.msra.mxu0 %v80
    %192 = vmatprep.subr.mxu0 0.0
    %193 = vmatpush1.msra.mxu0 %v81
    %194 = vmatprep.subr.mxu0 0.0
    %195 = vmatpush1.msra.mxu0 %v82
    %196 = vmatprep.subr.mxu0 0.0
    %197 = vmatpush1.msra.mxu0 %v83
    %198 = vmatprep.subr.mxu0 0.0
    %199 = vmatpush1.msra.mxu0 %v84
    %200 = vmatprep.subr.mxu0 0.0
    %201 = vmatpush1.msra.mxu0 %v85
    %202 = vmatprep.subr.mxu0 0.0
    %203 = vmatpush1.msra.mxu0 %v86
    %204 = vmatprep.subr.mxu0 0.0
    %205 = vmatpush1.msra.mxu0 %v87
    %206 = vmatprep.subr.mxu0 0.0
    %207 = vmatpush1.msra.mxu0 %v88
    %208 = vmatprep.subr.mxu0 0.0
    %209 = vmatpush1.msra.mxu0 0.0
    %210 = vmatprep.subr.mxu0 0.0
    %211 = vmatpush1.msra.mxu0 0.0
    %212 = vmatprep.subr.mxu0 0.0
    %213 = vmatpush1.msra.mxu0 0.0
    %214 = vmatprep.subr.mxu0 0.0
    %215 = vmatpush1.msra.mxu0 0.0
    %216 = vmatprep.subr.mxu0 0.0
    %217 = vmatpush1.msra.mxu0 0.0
    %218 = vmatprep.subr.mxu0 0.0
    %219 = vmatpush1.msra.mxu0 0.0
    %220 = vmatprep.subr.mxu0 0.0
    %221 = vmatpush1.msra.mxu0 0.0
    %222 = vmatprep.subr.mxu0 0.0
    %223 = vmatpush1.msra.mxu0 0.0
    %224 = vmatprep.subr.mxu0 0.0
    %225 = vmatpush1.msra.mxu0 0.0
    %226 = vmatprep.subr.mxu0 0.0
    %227 = vmatpush1.msra.mxu0 0.0
    %228 = vmatprep.subr.mxu0 0.0
    %229 = vmatpush1.msra.mxu0 0.0
    %230 = vmatprep.subr.mxu0 0.0
    %231 = vmatpush1.msra.mxu0 0.0
    %232 = vmatprep.subr.mxu0 0.0
    %233 = vmatpush1.msra.mxu0 0.0
    %234 = vmatprep.subr.mxu0 0.0
    %235 = vmatpush1.msra.mxu0 0.0
    %236 = vmatprep.subr.mxu0 0.0
    %237 = vmatpush1.msra.mxu0 0.0
    %238 = vmatprep.subr.mxu0 0.0
    %239 = vmatpush1.msra.mxu0 0.0
    %240 = vmatprep.mubr.f32.mxu0 0.0
    %241 = vmatmul.mubr.f32.gmra.mrb[0].mxu0 %v72
    %v242 = vpop.f32.mrb[0].mxu0
    %v243 = vadd.f32 %v173, %v242
    %v244 = vpop.f32.mrb[0].mxu0
    %245 = vdwg.mxu0
    %v246 = vld [vmem:[%s4] sm:$0x1]
    %v248 = vlaneseq
    %v249 = vshrl.u32 %v248, 7
    %v250 = vsub.s32 0, %v249
    %v251 = vrot.slane %v246, %v250
    %v253 = vadd.f32 %v243, %v251
    %v254 = vmul.f32 %v253, 0.5
    %v255 = vtanh.pop %v254
    %v256 = vmul.f32 %v255, 0.5
    %v257 = vadd.f32 %v256, 0.5
    %258 = vst [vmem:[#allocation10] sm:$0xff] %v257
    // Predicated region
    $region38: #{tpu_custom_call.1} parent=1 // pred_check
      _
    $region39: #{tpu_custom_call.1} parent=1 // pred_check_branch
      %260 = sbr.rel (0) target = $region41
    $region40: #{tpu_custom_call.1} parent=1 // pred_region
      %s262 = ssub.s32 128, 128
      %263 = vsyncadd [#allocation4], %s262
      %s265 = sshll.u32 [#allocation10], 4
      %s266 = int_to_ptr.vmem [resolvable:$true] %s265
      %268 = dma.vmem_to_hbm [thread:$0]  %s266, 128, %s5, [#allocation4]
    $region41: #{tpu_custom_call.1} parent=1 // pred_fallthru
      _
    // Predicated region
    $region42: #{tpu_custom_call.1} parent=1 // pred_check
      _
    $region43: #{tpu_custom_call.1} parent=1 // pred_check_branch
      %270 = sbr.rel (0) target = $region45
    $region44: #{tpu_custom_call.1} parent=1 // pred_region
      %271 = dma.done [#allocation4], 128
    $region45: #{tpu_custom_call.1} parent=1 // pred_fallthru
      _
    %272 = vsyncpa [#allocation3], 1
    %273 = vsyncpa [#allocation6], 1
    %274 = vsyncpa [#allocation9], 1
    %275 = vsyncpa [#allocation4], 1

</llo_original>
